<compile_context>
chip_gen: v7x
topology: tpu7x:2x2x1
jax: 0.10.0
libtpu: 0.0.40
codegen_flags: <defaults>
</compile_context>

<pallas_src>
import functools

import jax
import jax.numpy as jnp
from jax import lax
from jax.experimental import pallas as pl
from jax.experimental.pallas import tpu as pltpu


def _round_up(x, n):
    return (x + n - 1) // n * n


def _cnn_block_kernel(w_ref, a_ref, b_ref, g_ref, beta_ref, o_ref,
                      y_ref, sum_ref, ssq_ref, scale_ref, shift_ref,
                      *, tm, m_real, eps, slope):
    phase = pl.program_id(0)
    i = pl.program_id(1)
    n_tiles = pl.num_programs(1)
    off = pl.multiple_of(i * tm, tm)
    has_pad_tail = (m_real % tm) != 0  # static Python bool

    @pl.when(phase == 0)
    def _gemm_and_stats():
        @pl.when(i == 0)
        def _():
            sum_ref[...] = jnp.zeros_like(sum_ref)
            ssq_ref[...] = jnp.zeros_like(ssq_ref)

        # (C_out_pad, K_pad) @ (K_pad, tm) -> (C_out_pad, tm); lane dim = tm.
        y = jnp.dot(w_ref[...], a_ref[...],
                    preferred_element_type=jnp.float32) + b_ref[...]
        y_ref[:, pl.ds(off, tm)] = y

        if has_pad_tail:
            # Only the last tile can contain padded (zero-input) columns.
            @pl.when(i == n_tiles - 1)
            def _():
                col = off + lax.broadcasted_iota(jnp.int32, (1, tm), 1)
                ym = jnp.where(col < m_real, y, 0.0)
                sum_ref[...] += jnp.sum(ym, axis=1, keepdims=True)
                ssq_ref[...] += jnp.sum(ym * ym, axis=1, keepdims=True)

            @pl.when(i < n_tiles - 1)
            def _():
                sum_ref[...] += jnp.sum(y, axis=1, keepdims=True)
                ssq_ref[...] += jnp.sum(y * y, axis=1, keepdims=True)
        else:
            sum_ref[...] += jnp.sum(y, axis=1, keepdims=True)
            ssq_ref[...] += jnp.sum(y * y, axis=1, keepdims=True)

    @pl.when(phase == 1)
    def _bn_act():
        # Compute per-channel scale/shift exactly once, reuse for every tile.
        @pl.when(i == 0)
        def _():
            inv_m = 1.0 / m_real
            mean = sum_ref[...] * inv_m
            var = ssq_ref[...] * inv_m - mean * mean   # biased variance (BN train mode)
            inv_std = lax.rsqrt(var + eps)
            scale = g_ref[...] * inv_std
            scale_ref[...] = scale
            shift_ref[...] = beta_ref[...] - mean * scale

        y = y_ref[:, pl.ds(off, tm)]
        yn = y * scale_ref[...] + shift_ref[...]
        o_ref[...] = jnp.where(yn > 0, yn, slope * yn)


def cnn_block_forward(x, weight, bias, gamma, beta, *, stride, padding,
                      eps=1e-5, slope=0.1, tm=512):
    n, c_in, h, w = x.shape
    c_out, c_in_w, kh, kw = weight.shape
    assert c_in == c_in_w
    h_out = (h + 2 * padding - kh) // stride + 1
    w_out = (w + 2 * padding - kw) // stride + 1

    m_real = n * h_out * w_out
    tm = max(128, _round_up(tm, 128))
    tm = min(tm, _round_up(m_real, 128))
    m_pad = _round_up(m_real, tm)
    n_tiles = m_pad // tm

    k_dim = c_in * kh * kw
    k_pad = _round_up(k_dim, 8)
    c_out_pad = _round_up(c_out, 8)

    # --- im2col, built directly in channel-major (K, M) layout ------------------
    # TODO(synk): fuse im2col into the kernel (per-kernel-position shifted GEMMs)
    # to avoid materializing the KH*KW-times-larger a^T matrix in HBM.
    xp = jnp.pad(x.astype(jnp.float32),
                 ((0, 0), (0, 0), (padding, padding), (padding, padding)))
    patches = []
    for ki in range(kh):
        for kj in range(kw):
            patches.append(
                xp[:, :, ki:ki + stride * h_out:stride, kj:kj + stride * w_out:stride])
    cols = jnp.stack(patches, axis=0)                            # (KH*KW, N, C_in, Ho, Wo)
    a_t = cols.transpose(2, 0, 1, 3, 4).reshape(k_dim, m_real)   # row = c*(KH*KW)+ki*KW+kj
    a_t = jnp.pad(a_t, ((0, k_pad - k_dim), (0, m_pad - m_real)))

    w2 = weight.reshape(c_out, k_dim).astype(jnp.float32)
    w2 = jnp.pad(w2, ((0, c_out_pad - c_out), (0, k_pad - k_dim)))
    b_col = jnp.pad(bias.astype(jnp.float32).reshape(c_out, 1),
                    ((0, c_out_pad - c_out), (0, 0)))
    g_col = jnp.pad(gamma.astype(jnp.float32).reshape(c_out, 1),
                    ((0, c_out_pad - c_out), (0, 0)))
    beta_col = jnp.pad(beta.astype(jnp.float32).reshape(c_out, 1),
                       ((0, c_out_pad - c_out), (0, 0)))

    # VMEM budget: double-buffered input/output blocks + persistent y scratch.
    est_bytes = 4 * (2 * (k_pad * tm + c_out_pad * k_pad + 3 * c_out_pad)
                     + 2 * c_out_pad * tm
                     + c_out_pad * m_pad + 4 * c_out_pad)
    # TODO(synk): add a two-pass (y in HBM) fallback when y does not fit in VMEM.
    assert est_bytes < 40 * (1 << 20), "conv output too large for fused VMEM-resident path"
    vmem_limit = int(min(max(4 * est_bytes, 16 << 20), 48 << 20))

    out_t = pl.pallas_call(
        functools.partial(_cnn_block_kernel, tm=tm, m_real=m_real,
                          eps=eps, slope=slope),
        out_shape=jax.ShapeDtypeStruct((c_out_pad, m_pad), jnp.float32),
        grid_spec=pltpu.PrefetchScalarGridSpec(
            num_scalar_prefetch=0,
            grid=(2, n_tiles),                                            # (phase, M tile)
            in_specs=[
                pl.BlockSpec((c_out_pad, k_pad), lambda p, i: (0, 0)),    # W2 (full, fetched once)
                pl.BlockSpec((k_pad, tm), lambda p, i: (0, i * (1 - p))),  # a^T (streamed in phase 0)
                pl.BlockSpec((c_out_pad, 1), lambda p, i: (0, 0)),        # conv bias
                pl.BlockSpec((c_out_pad, 1), lambda p, i: (0, 0)),        # gamma
                pl.BlockSpec((c_out_pad, 1), lambda p, i: (0, 0)),        # beta
            ],
            # During phase 0 the out block index stays at 0 (no writeback of
            # unwritten data); phase 1 writes each tile exactly once.
            out_specs=pl.BlockSpec((c_out_pad, tm), lambda p, i: (0, i * p)),
            scratch_shapes=[
                pltpu.VMEM((c_out_pad, m_pad), jnp.float32),   # y (conv output, VMEM-resident)
                pltpu.VMEM((c_out_pad, 1), jnp.float32),       # per-channel sum
                pltpu.VMEM((c_out_pad, 1), jnp.float32),       # per-channel sum of squares
                pltpu.VMEM((c_out_pad, 1), jnp.float32),       # scale = gamma / std
                pltpu.VMEM((c_out_pad, 1), jnp.float32),       # shift = beta - mean * scale
            ]),
        # Both axes carry state through VMEM scratch -> must be sequential.
        # TODO(synk): on v7x split the M axis across the 2 TensorCores with
        # per-core partial stats reduced before phase 1.
        compiler_params=pltpu.CompilerParams(
            dimension_semantics=("arbitrary", "arbitrary"),
            vmem_limit_bytes=vmem_limit),
    )(w2, a_t, b_col, g_col, beta_col)

    out = out_t[:c_out, :m_real].reshape(c_out, n, h_out, w_out).transpose(1, 0, 2, 3)
    return out


def _reference(x, weight, bias, gamma, beta, *, stride, padding, eps=1e-5, slope=0.1):
    y = lax.conv_general_dilated(
        x, weight, (stride, stride), [(padding, padding), (padding, padding)],
        dimension_numbers=("NCHW", "OIHW", "NCHW"), precision=lax.Precision.HIGHEST)
    y = y + bias.reshape(1, -1, 1, 1)
    mean = y.mean(axis=(0, 2, 3), keepdims=True)
    var = y.var(axis=(0, 2, 3), keepdims=True)      # biased variance, as in BN forward
    yn = (y - mean) / jnp.sqrt(var + eps) * gamma.reshape(1, -1, 1, 1) + beta.reshape(1, -1, 1, 1)
    return jnp.where(yn > 0, yn, slope * yn)


if __name__ == "__main__":
    # CNNBlock(in_channels=4, out_channels=8, kernel_size=3, stride=1, padding=1)
    N, C_IN, H, W = 2, 4, 16, 16
    C_OUT, K, STRIDE, PAD = 8, 3, 1, 1

    key = jax.random.PRNGKey(0)
    kx, kw, kb, kg, kbeta = jax.random.split(key, 5)
    x = jax.random.normal(kx, (N, C_IN, H, W), jnp.float32)
    weight = 0.1 * jax.random.normal(kw, (C_OUT, C_IN, K, K), jnp.float32)
    bias = 0.1 * jax.random.normal(kb, (C_OUT,), jnp.float32)
    gamma = 1.0 + 0.1 * jax.random.normal(kg, (C_OUT,), jnp.float32)
    beta = 0.1 * jax.random.normal(kbeta, (C_OUT,), jnp.float32)

    out = cnn_block_forward(x, weight, bias, gamma, beta, stride=STRIDE, padding=PAD)
    out = jax.block_until_ready(out)

    ref = _reference(x, weight, bias, gamma, beta, stride=STRIDE, padding=PAD)
    assert out.shape == ref.shape, (out.shape, ref.shape)
    assert jnp.allclose(out, ref, atol=2e-2, rtol=2e-2), float(jnp.max(jnp.abs(out - ref)))

    print("KERNEL_OK")
</pallas_src>

<mosaic_0001>
module attributes {stable_mosaic.version = 11 : i64} {
  func.func @_cnn_block_kernel(%arg0: i32, %arg1: i32, %arg2: memref<8x40xf32, #tpu.memory_space<vmem>>, %arg3: memref<40x512xf32, #tpu.memory_space<vmem>>, %arg4: memref<8x1xf32, #tpu.memory_space<vmem>>, %arg5: memref<8x1xf32, #tpu.memory_space<vmem>>, %arg6: memref<8x1xf32, #tpu.memory_space<vmem>>, %arg7: memref<8x512xf32, #tpu.memory_space<vmem>>, %arg8: memref<8x512xf32, #tpu.memory_space<vmem>>, %arg9: memref<8x1xf32, #tpu.memory_space<vmem>>, %arg10: memref<8x1xf32, #tpu.memory_space<vmem>>, %arg11: memref<8x1xf32, #tpu.memory_space<vmem>>, %arg12: memref<8x1xf32, #tpu.memory_space<vmem>>) attributes {dimension_semantics = [#tpu.dimension_semantics<arbitrary>, #tpu.dimension_semantics<arbitrary>], iteration_bounds = array<i64: 2, 1>, scalar_prefetch = 0 : i64, scratch_operands = 5 : i64, tpu.core_type = #tpu.core_type<tc>, window_params = [{pipeline_mode = #tpu.pipeline_mode<synchronous>, transform_indices = @transform_0, window_bounds = array<i64: 8, 40>}, {transform_indices = @transform_1, window_bounds = array<i64: 40, 512>}, {pipeline_mode = #tpu.pipeline_mode<synchronous>, transform_indices = @transform_2, window_bounds = array<i64: 8, 1>}, {pipeline_mode = #tpu.pipeline_mode<synchronous>, transform_indices = @transform_3, window_bounds = array<i64: 8, 1>}, {pipeline_mode = #tpu.pipeline_mode<synchronous>, transform_indices = @transform_4, window_bounds = array<i64: 8, 1>}, {transform_indices = @transform_5, window_bounds = array<i64: 8, 512>}]} {
    %c512_i32 = arith.constant 512 : i32
    %0 = arith.muli %arg1, %c512_i32 : i32
    %1 = tpu.assume_multiple %0, 512 : i32
    %c0_i32 = arith.constant 0 : i32
    %2 = arith.cmpi eq, %arg0, %c0_i32 : i32
    %3 = arith.extui %2 : i1 to i32
    %c0_i32_0 = arith.constant 0 : i32
    %4 = arith.cmpi ne, %3, %c0_i32_0 : i32
    scf.if %4 {
      %c0_i32_2 = arith.constant 0 : i32
      %8 = arith.cmpi eq, %arg1, %c0_i32_2 : i32
      %9 = arith.extui %8 : i1 to i32
      %c0_i32_3 = arith.constant 0 : i32
      %10 = arith.cmpi ne, %9, %c0_i32_3 : i32
      scf.if %10 {
        %cst_20 = arith.constant 0.000000e+00 : f32
        %30 = vector.broadcast %cst_20 : f32 to vector<8x1xf32>
        %c0_21 = arith.constant 0 : index
        %c0_22 = arith.constant 0 : index
        %31 = vector.load %arg9[%c0_21, %c0_22] : memref<8x1xf32, #tpu.memory_space<vmem>>, vector<8x1xf32>
        tpu.vector_store %arg9[%c0_21, %c0_22], %30 {strides = array<i32>} : memref<8x1xf32, #tpu.memory_space<vmem>>, vector<8x1xf32>,
        %cst_23 = arith.constant 0.000000e+00 : f32
        %32 = vector.broadcast %cst_23 : f32 to vector<8x1xf32>
        %c0_24 = arith.constant 0 : index
        %c0_25 = arith.constant 0 : index
        %33 = vector.load %arg10[%c0_24, %c0_25] : memref<8x1xf32, #tpu.memory_space<vmem>>, vector<8x1xf32>
        tpu.vector_store %arg10[%c0_24, %c0_25], %32 {strides = array<i32>} : memref<8x1xf32, #tpu.memory_space<vmem>>, vector<8x1xf32>,
      } else {
      }
      %c0 = arith.constant 0 : index
      %c0_4 = arith.constant 0 : index
      %11 = vector.load %arg2[%c0, %c0_4] : memref<8x40xf32, #tpu.memory_space<vmem>>, vector<8x40xf32>
      %c0_5 = arith.constant 0 : index
      %c0_6 = arith.constant 0 : index
      %12 = vector.load %arg3[%c0_5, %c0_6] : memref<40x512xf32, #tpu.memory_space<vmem>>, vector<40x512xf32>
      %cst = arith.constant dense<0.000000e+00> : vector<8x512xf32>
      %13 = tpu.matmul %11, %12, %cst {dimension_numbers = #tpu.dot_dimension_numbers<[1], [0], [0], [1], [0, 0, 1, 1], [], []>} : vector<8x40xf32>, vector<40x512xf32>, vector<8x512xf32> -> vector<8x512xf32>
      %c0_7 = arith.constant 0 : index
      %c0_8 = arith.constant 0 : index
      %14 = vector.load %arg4[%c0_7, %c0_8] : memref<8x1xf32, #tpu.memory_space<vmem>>, vector<8x1xf32>
      %15 = vector.broadcast %14 : vector<8x1xf32> to vector<8x512xf32>
      %16 = arith.addf %13, %15 : vector<8x512xf32>
      %c0_9 = arith.constant 0 : index
      %17 = arith.index_cast %1 : i32 to index
      %18 = vector.load %arg8[%c0_9, %17] : memref<8x512xf32, #tpu.memory_space<vmem>>, vector<8x512xf32>
      tpu.vector_store %arg8[%c0_9, %17], %16 {strides = array<i32>} : memref<8x512xf32, #tpu.memory_space<vmem>>, vector<8x512xf32>,
      %c0_10 = arith.constant 0 : index
      %c0_11 = arith.constant 0 : index
      %19 = vector.load %arg9[%c0_10, %c0_11] : memref<8x1xf32, #tpu.memory_space<vmem>>, vector<8x1xf32>
      %cst_12 = arith.constant dense<0.000000e+00> : vector<8xf32>
      %20 = vector.multi_reduction <add>, %16, %cst_12 [1] : vector<8x512xf32> to vector<8xf32>
      %21 = vector.shape_cast %20 : vector<8xf32> to vector<8x1xf32>
      %22 = arith.addf %19, %21 : vector<8x1xf32>
      %c0_13 = arith.constant 0 : index
      %c0_14 = arith.constant 0 : index
      %23 = vector.load %arg9[%c0_13, %c0_14] : memref<8x1xf32, #tpu.memory_space<vmem>>, vector<8x1xf32>
      tpu.vector_store %arg9[%c0_13, %c0_14], %22 {strides = array<i32>} : memref<8x1xf32, #tpu.memory_space<vmem>>, vector<8x1xf32>,
      %c0_15 = arith.constant 0 : index
      %c0_16 = arith.constant 0 : index
      %24 = vector.load %arg10[%c0_15, %c0_16] : memref<8x1xf32, #tpu.memory_space<vmem>>, vector<8x1xf32>
      %25 = arith.mulf %16, %16 : vector<8x512xf32>
      %cst_17 = arith.constant dense<0.000000e+00> : vector<8xf32>
      %26 = vector.multi_reduction <add>, %25, %cst_17 [1] : vector<8x512xf32> to vector<8xf32>
      %27 = vector.shape_cast %26 : vector<8xf32> to vector<8x1xf32>
      %28 = arith.addf %24, %27 : vector<8x1xf32>
      %c0_18 = arith.constant 0 : index
      %c0_19 = arith.constant 0 : index
      %29 = vector.load %arg10[%c0_18, %c0_19] : memref<8x1xf32, #tpu.memory_space<vmem>>, vector<8x1xf32>
      tpu.vector_store %arg10[%c0_18, %c0_19], %28 {strides = array<i32>} : memref<8x1xf32, #tpu.memory_space<vmem>>, vector<8x1xf32>,
    } else {
    }
    %c1_i32 = arith.constant 1 : i32
    %5 = arith.cmpi eq, %arg0, %c1_i32 : i32
    %6 = arith.extui %5 : i1 to i32
    %c0_i32_1 = arith.constant 0 : i32
    %7 = arith.cmpi ne, %6, %c0_i32_1 : i32
    scf.if %7 {
      %c0_i32_2 = arith.constant 0 : i32
      %8 = arith.cmpi eq, %arg1, %c0_i32_2 : i32
      %9 = arith.extui %8 : i1 to i32
      %c0_i32_3 = arith.constant 0 : i32
      %10 = arith.cmpi ne, %9, %c0_i32_3 : i32
      scf.if %10 {
        %c0_11 = arith.constant 0 : index
        %c0_12 = arith.constant 0 : index
        %25 = vector.load %arg9[%c0_11, %c0_12] : memref<8x1xf32, #tpu.memory_space<vmem>>, vector<8x1xf32>
        %cst_13 = arith.constant 0.001953125 : f32
        %26 = vector.broadcast %cst_13 : f32 to vector<8x1xf32>
        %27 = arith.mulf %25, %26 : vector<8x1xf32>
        %c0_14 = arith.constant 0 : index
        %c0_15 = arith.constant 0 : index
        %28 = vector.load %arg10[%c0_14, %c0_15] : memref<8x1xf32, #tpu.memory_space<vmem>>, vector<8x1xf32>
        %cst_16 = arith.constant 0.001953125 : f32
        %29 = vector.broadcast %cst_16 : f32 to vector<8x1xf32>
        %30 = arith.mulf %28, %29 : vector<8x1xf32>
        %31 = arith.mulf %27, %27 : vector<8x1xf32>
        %32 = arith.subf %30, %31 : vector<8x1xf32>
        %cst_17 = arith.constant 9.99999974E-6 : f32
        %33 = vector.broadcast %cst_17 : f32 to vector<8x1xf32>
        %34 = arith.addf %32, %33 : vector<8x1xf32>
        %35 = math.rsqrt %34 : vector<8x1xf32>
        %c0_18 = arith.constant 0 : index
        %c0_19 = arith.constant 0 : index
        %36 = vector.load %arg5[%c0_18, %c0_19] : memref<8x1xf32, #tpu.memory_space<vmem>>, vector<8x1xf32>
        %37 = arith.mulf %36, %35 : vector<8x1xf32>
        %c0_20 = arith.constant 0 : index
        %c0_21 = arith.constant 0 : index
        %38 = vector.load %arg11[%c0_20, %c0_21] : memref<8x1xf32, #tpu.memory_space<vmem>>, vector<8x1xf32>
        tpu.vector_store %arg11[%c0_20, %c0_21], %37 {strides = array<i32>} : memref<8x1xf32, #tpu.memory_space<vmem>>, vector<8x1xf32>,
        %c0_22 = arith.constant 0 : index
        %c0_23 = arith.constant 0 : index
        %39 = vector.load %arg6[%c0_22, %c0_23] : memref<8x1xf32, #tpu.memory_space<vmem>>, vector<8x1xf32>
        %40 = arith.mulf %27, %37 : vector<8x1xf32>
        %41 = arith.subf %39, %40 : vector<8x1xf32>
        %c0_24 = arith.constant 0 : index
        %c0_25 = arith.constant 0 : index
        %42 = vector.load %arg12[%c0_24, %c0_25] : memref<8x1xf32, #tpu.memory_space<vmem>>, vector<8x1xf32>
        tpu.vector_store %arg12[%c0_24, %c0_25], %41 {strides = array<i32>} : memref<8x1xf32, #tpu.memory_space<vmem>>, vector<8x1xf32>,
      } else {
      }
      %c0 = arith.constant 0 : index
      %11 = arith.index_cast %1 : i32 to index
      %12 = vector.load %arg8[%c0, %11] : memref<8x512xf32, #tpu.memory_space<vmem>>, vector<8x512xf32>
      %c0_4 = arith.constant 0 : index
      %c0_5 = arith.constant 0 : index
      %13 = vector.load %arg11[%c0_4, %c0_5] : memref<8x1xf32, #tpu.memory_space<vmem>>, vector<8x1xf32>
      %14 = vector.broadcast %13 : vector<8x1xf32> to vector<8x512xf32>
      %15 = arith.mulf %12, %14 : vector<8x512xf32>
      %c0_6 = arith.constant 0 : index
      %c0_7 = arith.constant 0 : index
      %16 = vector.load %arg12[%c0_6, %c0_7] : memref<8x1xf32, #tpu.memory_space<vmem>>, vector<8x1xf32>
      %17 = vector.broadcast %16 : vector<8x1xf32> to vector<8x512xf32>
      %18 = arith.addf %15, %17 : vector<8x512xf32>
      %cst = arith.constant 0.000000e+00 : f32
      %19 = vector.broadcast %cst : f32 to vector<8x512xf32>
      %20 = arith.cmpf ogt, %18, %19 : vector<8x512xf32>
      %cst_8 = arith.constant 1.000000e-01 : f32
      %21 = vector.broadcast %cst_8 : f32 to vector<8x512xf32>
      %22 = arith.mulf %21, %18 : vector<8x512xf32>
      %23 = arith.select %20, %18, %22 : vector<8x512xi1>, vector<8x512xf32>
      %c0_9 = arith.constant 0 : index
      %c0_10 = arith.constant 0 : index
      %24 = vector.load %arg7[%c0_9, %c0_10] : memref<8x512xf32, #tpu.memory_space<vmem>>, vector<8x512xf32>
      tpu.vector_store %arg7[%c0_9, %c0_10], %23 {strides = array<i32>} : memref<8x512xf32, #tpu.memory_space<vmem>>, vector<8x512xf32>,
    } else {
    }
    return
  }
  func.func @transform_0(%arg0: i32, %arg1: i32) -> (i32, i32) {
    %c0_i32 = arith.constant 0 : i32
    %c0_i32_0 = arith.constant 0 : i32
    %c0_i32_1 = arith.constant 0 : i32
    return %c0_i32, %c0_i32_0 : i32, i32
  }
  func.func @transform_1(%arg0: i32, %arg1: i32) -> (i32, i32) {
    %c1_i32 = arith.constant 1 : i32
    %0 = arith.subi %c1_i32, %arg0 : i32
    %1 = arith.muli %arg1, %0 : i32
    %c0_i32 = arith.constant 0 : i32
    %c0_i32_0 = arith.constant 0 : i32
    return %c0_i32, %1 : i32, i32
  }
  func.func @transform_2(%arg0: i32, %arg1: i32) -> (i32, i32) {
    %c0_i32 = arith.constant 0 : i32
    %c0_i32_0 = arith.constant 0 : i32
    %c0_i32_1 = arith.constant 0 : i32
    return %c0_i32, %c0_i32_0 : i32, i32
  }
  func.func @transform_3(%arg0: i32, %arg1: i32) -> (i32, i32) {
    %c0_i32 = arith.constant 0 : i32
    %c0_i32_0 = arith.constant 0 : i32
    %c0_i32_1 = arith.constant 0 : i32
    return %c0_i32, %c0_i32_0 : i32, i32
  }
  func.func @transform_4(%arg0: i32, %arg1: i32) -> (i32, i32) {
    %c0_i32 = arith.constant 0 : i32
    %c0_i32_0 = arith.constant 0 : i32
    %c0_i32_1 = arith.constant 0 : i32
    return %c0_i32, %c0_i32_0 : i32, i32
  }
  func.func @transform_5(%arg0: i32, %arg1: i32) -> (i32, i32) {
    %0 = arith.muli %arg1, %arg0 : i32
    %c0_i32 = arith.constant 0 : i32
    %c0_i32_0 = arith.constant 0 : i32
    return %c0_i32, %0 : i32, i32
  }
}

</mosaic_0001>

<llo_original>
// kernel: tpu_custom_call.1
$region0: #{tpu_custom_call.1}
  #allocation0 [shape = 'u32[]', space=smem, size = 0x4, offset = 0x4, fixed_abs, tag = 'smem constant byte address 0x4 - core index']
  #allocation1 [shape = 'u32[144,128]{1,0:T(1,128)}', space=vmem, size = 0x12000, scoped, tag = 'internal scratch']
  #allocation2 [shape = 'f32[8,512]{1,0:T(8,128)}', space=vmem, size = 0x4000, scoped, tag = 'scratch operand']
  #allocation3 [shape = 'f32[8,1]{1,0:T(8,128)}', space=vmem, size = 0x1000, scoped, tag = 'scratch operand']
  #allocation4 [shape = 'f32[8,1]{1,0:T(8,128)}', space=vmem, size = 0x1000, scoped, tag = 'scratch operand']
  #allocation5 [shape = 'f32[8,1]{1,0:T(8,128)}', space=vmem, size = 0x1000, scoped, tag = 'scratch operand']
  #allocation6 [shape = 'f32[8,1]{1,0:T(8,128)}', space=vmem, size = 0x1000, scoped, tag = 'scratch operand']
  %s0 = inlined_call_operand.vmem [shape: f32[8,40], index: 0, kind: input, shape index: {}]
  %s1 = inlined_call_operand.hbm [shape: f32[40,512], index: 1, kind: input, shape index: {}]
  %s2 = inlined_call_operand.vmem [shape: f32[8,1], index: 2, kind: input, shape index: {}]
  %s3 = inlined_call_operand.vmem [shape: f32[8,1], index: 3, kind: input, shape index: {}]
  %s4 = inlined_call_operand.vmem [shape: f32[8,1], index: 4, kind: input, shape index: {}]
  %s5 = inlined_call_operand.hbm [shape: f32[8,512], index: 5, kind: output, shape index: {}]
  %s6 = sld [smem:[#allocation0]]
  $region73: #{tpu_custom_call.1} parent=0
    _
  %s8 = ssub.s32 1, %s6
  %s9 = scalar_select 0, %s8, %s6
  $region1: #{tpu_custom_call.1} parent=0
    #allocation7 [shape = 'u8[163840]{0}', space=vmem, size = 0x28000, scoped, tag = 'input window, operand 1']
    #allocation8 [shape = 's32[2]{0}', space=sflag, size = 0x8, scoped, tag = 'scoped memory for tpu_custom_call.1']
    #allocation9 [shape = 's32[2]{0}', space=sflag, size = 0x8, scoped, tag = 'scoped memory for tpu_custom_call.1']
    #allocation10 [shape = 'u8[32768]{0}', space=vmem, size = 0x8000, scoped, tag = 'output window, operand 0']
    %10 = vsyncpa [#allocation8], 0
    %s11 = scalar_lea.sflag [#allocation8], 1
    %12 = vsyncpa %s11, 0
    %13 = vsyncpa [#allocation9], 0
    %s14 = scalar_lea.sflag [#allocation9], 1
    %15 = vsyncpa %s14, 0
    loop: start=0, step=1, limit=4
    $region2: #{tpu_custom_call.1} parent=1 // loop_pre_header
      _
    $region3: #{tpu_custom_call.1} parent=1 // loop_header
      %s17 = sphi 0, %s21
      %p18 = scmp.ge.s32.totalorder %s17, 4
      %s24 = sphi 0, %s36
      %s25 = sphi 0, %s32
      %s26 = sphi 0, %s24
      %s27 = sphi 0, %s25
      %s28 = sphi 0, %s26
      %s29 = sphi 0, %s27
      %s37 = sphi 0, %s37
      %s39 = sphi 0, %s37
      %s40 = sphi 0, %s39
      %s54 = sphi 0, %s40
      %s64 = sphi 0, %s66
      %s67 = sphi 0, %s64
      %s68 = sphi 0, %s67
      %s84 = sphi 0, %s68
      %s88 = sphi 0, %s88
      %s90 = sphi 0, %s88
      %s91 = sphi 0, %s90
      %s105 = sphi 0, %s91
      %s109 = sphi 0, %s109
      %s111 = sphi 0, %s109
      %s112 = sphi 0, %s111
      %s126 = sphi 0, %s112
      %s130 = sphi 0, %s130
      %s132 = sphi 0, %s130
      %s133 = sphi 0, %s132
      %s147 = sphi 0, %s133
      %s155 = sphi 0, %s157
      %s158 = sphi 0, %s155
      %s159 = sphi 0, %s158
      %s175 = sphi 0, %s159
    $region4: #{tpu_custom_call.1} parent=1 // loop_header_branch
      %20 = sbr.rel (%p18) target = $region8
    $region5: #{tpu_custom_call.1} parent=1 // loop_body
      %s22 = ssub.s32 %s17, 1
      %s23 = ssub.s32 %s17, 2
      %s30 = sadd.s32 1, %s25
      %p31 = scmp.ge.s32.totalorder %s30, 1
      %s32 = scalar_select %p31, 0, %s30
      %s33 = sadd.s32 1, %s24
      %s34 = scalar_select %p31, %s33, %s24
      %p35 = scmp.ge.s32.totalorder %s34, 2
      %s36 = scalar_select %p35, 0, %s34
      %s38 = sadd.s32 %s37, 1
      %p41 = scmp.eq.s32.totalorder %s17, 1
      %p42 = scmp.ne.s32.totalorder %s37, %s39
      %p43 = scmp.eq.s32.totalorder %s17, 0
      %p44 = por %p42, %p43
      %p45 = scmp.ne.s32.totalorder %s37, %s39
      %p46 = scmp.eq.s32.totalorder %s22, 1
      %p47 = por %p45, %p46
      %p48 = scmp.ne.s32.totalorder %s39, %s40
      %p49 = scmp.eq.s32.totalorder %s22, 0
      %p50 = por %p48, %p49
      %p51 = scmp.ne.s32.totalorder %s39, %s40
      %p52 = scmp.eq.s32.totalorder %s23, 1
      %p53 = por %p51, %p52
      %p55 = scmp.ne.s32.totalorder %s40, %s54
      %p56 = scmp.eq.s32.totalorder %s23, 0
      %p57 = por %p55, %p56
      %s58 = ssub.s32 1, %s24
      %s59 = smul.u32 %s25, %s58
      %s60 = ssub.s32 1, %s36
      %s61 = smul.u32 %s32, %s60
      %s62 = ssub.s32 %s59, %s61
      %p63 = scmp.eq.s32.totalorder %s62, 0
      %s65 = sadd.s32 %s64, 1
      %s66 = scalar_select %p63, %s64, %s65
      %p69 = pneg %p63
      %p70 = scmp.eq.s32.totalorder %s17, 1
      %p71 = por %p69, %p70
      %p72 = scmp.ne.s32.totalorder %s64, %s67
      %p73 = scmp.eq.s32.totalorder %s17, 0
      %p74 = por %p72, %p73
      %p75 = scmp.ne.s32.totalorder %s64, %s67
      %p76 = scmp.eq.s32.totalorder %s22, 1
      %p77 = por %p75, %p76
      %p78 = scmp.ne.s32.totalorder %s67, %s68
      %p79 = scmp.eq.s32.totalorder %s22, 0
      %p80 = por %p78, %p79
      %p81 = scmp.ne.s32.totalorder %s67, %s68
      %p82 = scmp.eq.s32.totalorder %s23, 1
      %p83 = por %p81, %p82
      %p85 = scmp.ne.s32.totalorder %s68, %s84
      %p86 = scmp.eq.s32.totalorder %s23, 0
      %p87 = por %p85, %p86
      %s89 = sadd.s32 %s88, 1
      %p92 = scmp.eq.s32.totalorder %s17, 1
      %p93 = scmp.ne.s32.totalorder %s88, %s90
      %p94 = scmp.eq.s32.totalorder %s17, 0
      %p95 = por %p93, %p94
      %p96 = scmp.ne.s32.totalorder %s88, %s90
      %p97 = scmp.eq.s32.totalorder %s22, 1
      %p98 = por %p96, %p97
      %p99 = scmp.ne.s32.totalorder %s90, %s91
      %p100 = scmp.eq.s32.totalorder %s22, 0
      %p101 = por %p99, %p100
      %p102 = scmp.ne.s32.totalorder %s90, %s91
      %p103 = scmp.eq.s32.totalorder %s23, 1
      %p104 = por %p102, %p103
      %p106 = scmp.ne.s32.totalorder %s91, %s105
      %p107 = scmp.eq.s32.totalorder %s23, 0
      %p108 = por %p106, %p107
      %s110 = sadd.s32 %s109, 1
      %p113 = scmp.eq.s32.totalorder %s17, 1
      %p114 = scmp.ne.s32.totalorder %s109, %s111
      %p115 = scmp.eq.s32.totalorder %s17, 0
      %p116 = por %p114, %p115
      %p117 = scmp.ne.s32.totalorder %s109, %s111
      %p118 = scmp.eq.s32.totalorder %s22, 1
      %p119 = por %p117, %p118
      %p120 = scmp.ne.s32.totalorder %s111, %s112
      %p121 = scmp.eq.s32.totalorder %s22, 0
      %p122 = por %p120, %p121
      %p123 = scmp.ne.s32.totalorder %s111, %s112
      %p124 = scmp.eq.s32.totalorder %s23, 1
      %p125 = por %p123, %p124
      %p127 = scmp.ne.s32.totalorder %s112, %s126
      %p128 = scmp.eq.s32.totalorder %s23, 0
      %p129 = por %p127, %p128
      %s131 = sadd.s32 %s130, 1
      %p134 = scmp.eq.s32.totalorder %s17, 1
      %p135 = scmp.ne.s32.totalorder %s130, %s132
      %p136 = scmp.eq.s32.totalorder %s17, 0
      %p137 = por %p135, %p136
      %p138 = scmp.ne.s32.totalorder %s130, %s132
      %p139 = scmp.eq.s32.totalorder %s22, 1
      %p140 = por %p138, %p139
      %p141 = scmp.ne.s32.totalorder %s132, %s133
      %p142 = scmp.eq.s32.totalorder %s22, 0
      %p143 = por %p141, %p142
      %p144 = scmp.ne.s32.totalorder %s132, %s133
      %p145 = scmp.eq.s32.totalorder %s23, 1
      %p146 = por %p144, %p145
      %p148 = scmp.ne.s32.totalorder %s133, %s147
      %p149 = scmp.eq.s32.totalorder %s23, 0
      %p150 = por %p148, %p149
      %s151 = smul.u32 %s25, %s24
      %s152 = smul.u32 %s32, %s36
      %s153 = ssub.s32 %s151, %s152
      %p154 = scmp.eq.s32.totalorder %s153, 0
      %s156 = sadd.s32 %s155, 1
      %s157 = scalar_select %p154, %s155, %s156
      %p160 = pneg %p154
      %p161 = scmp.eq.s32.totalorder %s17, 1
      %p162 = por %p160, %p161
      %p163 = scmp.ne.s32.totalorder %s155, %s158
      %p164 = scmp.eq.s32.totalorder %s17, 0
      %p165 = por %p163, %p164
      %p166 = scmp.ne.s32.totalorder %s155, %s158
      %p167 = scmp.eq.s32.totalorder %s22, 1
      %p168 = por %p166, %p167
      %p169 = scmp.ne.s32.totalorder %s158, %s159
      %p170 = scmp.eq.s32.totalorder %s22, 0
      %p171 = por %p169, %p170
      %p172 = scmp.ne.s32.totalorder %s158, %s159
      %p173 = scmp.eq.s32.totalorder %s23, 1
      %p174 = por %p172, %p173
      %p176 = scmp.ne.s32.totalorder %s159, %s175
      %p177 = scmp.eq.s32.totalorder %s23, 0
      %p178 = por %p176, %p177
      %p179 = scmp.le.s32.totalorder 1, %s17
      %p180 = scmp.lt.s32.totalorder %s17, 3
      %p181 = pnand %p179, %p180
      %p182 = pneg %p181
      // Predicated region
      $region9: #{tpu_custom_call.1} parent=5 // pred_check
        _
      $region10: #{tpu_custom_call.1} parent=5 // pred_check_branch
        %184 = sbr.rel (%p181) target = $region12
      $region11: #{tpu_custom_call.1} parent=5 // pred_region
        %s185 = ssub.s32 %s17, 1
        // Predicated region
        $region13: #{tpu_custom_call.1} parent=11 // pred_check
          %p186 = pneg %p50
        $region14: #{tpu_custom_call.1} parent=11 // pred_check_branch
          %188 = sbr.rel (%p186) target = $region16
        $region15: #{tpu_custom_call.1} parent=11 // pred_region
          _
        $region16: #{tpu_custom_call.1} parent=11 // pred_fallthru
          _
        // Predicated region
        $region17: #{tpu_custom_call.1} parent=11 // pred_check
          %p189 = pneg %p101
        $region18: #{tpu_custom_call.1} parent=11 // pred_check_branch
          %191 = sbr.rel (%p189) target = $region20
        $region19: #{tpu_custom_call.1} parent=11 // pred_region
          _
        $region20: #{tpu_custom_call.1} parent=11 // pred_fallthru
          _
        // Predicated region
        $region21: #{tpu_custom_call.1} parent=11 // pred_check
          %p192 = pneg %p122
        $region22: #{tpu_custom_call.1} parent=11 // pred_check_branch
          %194 = sbr.rel (%p192) target = $region24
        $region23: #{tpu_custom_call.1} parent=11 // pred_region
          _
        $region24: #{tpu_custom_call.1} parent=11 // pred_fallthru
          _
        // Predicated region
        $region25: #{tpu_custom_call.1} parent=11 // pred_check
          %p195 = pneg %p143
        $region26: #{tpu_custom_call.1} parent=11 // pred_check_branch
          %197 = sbr.rel (%p195) target = $region28
        $region27: #{tpu_custom_call.1} parent=11 // pred_region
          _
        $region28: #{tpu_custom_call.1} parent=11 // pred_fallthru
          _
      $region12: #{tpu_custom_call.1} parent=5 // pred_fallthru
        _
      %p198 = scmp.lt.s32.totalorder %s17, 2
      // Predicated region
      $region29: #{tpu_custom_call.1} parent=5 // pred_check
        %p199 = pneg %p198
      $region30: #{tpu_custom_call.1} parent=5 // pred_check_branch
        %201 = sbr.rel (%p199) target = $region32
      $region31: #{tpu_custom_call.1} parent=5 // pred_region
        // Predicated region
        $region33: #{tpu_custom_call.1} parent=31 // pred_check
          %p202 = pneg %p74
        $region34: #{tpu_custom_call.1} parent=31 // pred_check_branch
          %204 = sbr.rel (%p202) target = $region36
        $region35: #{tpu_custom_call.1} parent=31 // pred_region
          %s205 = sand.u32 %s64, 1
          %s206 = scalar_lea.sflag [#allocation8], %s205
          %s207 = sand.u32 %s64, 1
          %s208 = smul.addr %s207, 160
          %s209 = scalar_lea.vmem [#allocation7], %s208
          %s210 = ssub.s32 1, %s24
          %s211 = smul.u32 %s25, %s210
          %s212 = smul.u32 4, %s211
          %s214 = ssub.s32 2560, 2560
          %215 = vsyncadd %s206, %s214
          %s216 = smul.addr %s212, 128
          %s217 = scalar_lea.hbm %s1, %s216
          %s218 = sshll.u32 %s209, 4
          %s219 = int_to_ptr.vmem [resolvable:$true] %s218
          %224 = dma.hbm_to_vmem [thread:$0]  %s217, 2560, %s219, %s206, 512, 512, 32
        $region36: #{tpu_custom_call.1} parent=31 // pred_fallthru
          _
      $region32: #{tpu_custom_call.1} parent=5 // pred_fallthru
        _
      %p225 = scmp.le.s32.totalorder 1, %s17
      %p226 = scmp.lt.s32.totalorder %s17, 3
      %p227 = pnand %p225, %p226
      %p228 = pneg %p227
      // Predicated region
      $region37: #{tpu_custom_call.1} parent=5 // pred_check
        _
      $region38: #{tpu_custom_call.1} parent=5 // pred_check_branch
        %230 = sbr.rel (%p227) target = $region40
      $region39: #{tpu_custom_call.1} parent=5 // pred_region
        %s231 = ssub.s32 %s17, 1
        %s232 = sand.u32 %s67, 1
        %s233 = scalar_lea.sflag [#allocation8], %s232
        %s234 = sand.u32 %s67, 1
        %s235 = smul.addr %s234, 160
        %s236 = scalar_lea.vmem [#allocation7], %s235
        // Predicated region
        $region41: #{tpu_custom_call.1} parent=39 // pred_check
          %p237 = pneg %p80
        $region42: #{tpu_custom_call.1} parent=39 // pred_check_branch
          %239 = sbr.rel (%p237) target = $region44
        $region43: #{tpu_custom_call.1} parent=39 // pred_region
          %240 = dma.done %s233, 2560
        $region44: #{tpu_custom_call.1} parent=39 // pred_fallthru
          _
        %p241 = pneg %p50
        %p242 = pneg %p47
        %s243 = sand.u32 %s67, 1
        %s244 = scalar_lea.sflag [#allocation8], %s243
        %s245 = sand.u32 %s67, 1
        %s246 = smul.addr %s245, 160
        %s247 = scalar_lea.vmem [#allocation7], %s246
        %p248 = pneg %p80
        %p249 = pneg %p77
        %p250 = pneg %p101
        %p251 = pneg %p98
        %p252 = pneg %p122
        %p253 = pneg %p119
        %p254 = pneg %p143
        %p255 = pneg %p140
        %p256 = pneg %p171
        %p257 = pneg %p168
        %s258 = sand.u32 %s158, 1
        %s259 = scalar_lea.sflag [#allocation9], %s258
        %s260 = sand.u32 %s158, 1
        %s261 = smul.addr %s260, 32
        %s262 = scalar_lea.vmem [#allocation10], %s261
        %s263 = ssub.s32 1, %s26
        %s264 = smul.u32 %s27, %s263
        %s265 = smul.u32 4, %s264
        %s266 = smul.u32 %s27, %s26
        %s267 = smul.u32 4, %s266
        %s268 = smul.u32 %s27, 512
        %p269 = scmp.eq.s32.totalorder %s26, 0
        // Predicated region
        $region45: #{tpu_custom_call.1} parent=39 // pred_check
          %p270 = pneg %p269
        $region46: #{tpu_custom_call.1} parent=39 // pred_check_branch
          %272 = sbr.rel (%p270) target = $region48
        $region47: #{tpu_custom_call.1} parent=39 // pred_region
          %p273 = scmp.eq.s32.totalorder %s27, 0
          // Predicated region
          $region49: #{tpu_custom_call.1} parent=47 // pred_check
            %p274 = pneg %p273
          $region50: #{tpu_custom_call.1} parent=47 // pred_check_branch
            %276 = sbr.rel (%p274) target = $region52
          $region51: #{tpu_custom_call.1} parent=47 // pred_region
            %vm277 = vcmask 7168
            %278 = vst.msk [vmem:[#allocation3] sm:$0xff] %vm277, 0.0
            %279 = vst.msk [vmem:[#allocation4] sm:$0xff] %vm277, 0.0
          $region52: #{tpu_custom_call.1} parent=47 // pred_fallthru
            _
          %v280 = vld [vmem:[%s0] sm:$0xff]
          %v281 = vld [vmem:[%s236] sm:$0xff]
          %v282 = vld [vmem:[%s236 + $0x8] sm:$0xff]
          %v283 = vld [vmem:[%s236 + $0x10] sm:$0xff]
          %v284 = vld [vmem:[%s236 + $0x18] sm:$0xff]
          %v285 = vld [vmem:[%s236 + $0x20] sm:$0xff]
          %v286 = vld [vmem:[%s236 + $0x28] sm:$0xff]
          %v287 = vld [vmem:[%s236 + $0x30] sm:$0xff]
          %v288 = vld [vmem:[%s236 + $0x38] sm:$0xff]
          %v289 = vld [vmem:[%s236 + $0x40] sm:$0xff]
          %v290 = vld [vmem:[%s236 + $0x48] sm:$0xff]
          %v291 = vld [vmem:[%s236 + $0x50] sm:$0xff]
          %v292 = vld [vmem:[%s236 + $0x58] sm:$0xff]
          %v293 = vld [vmem:[%s236 + $0x60] sm:$0xff]
          %v294 = vld [vmem:[%s236 + $0x68] sm:$0xff]
          %v295 = vld [vmem:[%s236 + $0x70] sm:$0xff]
          %v296 = vld [vmem:[%s236 + $0x78] sm:$0xff]
          %v297 = vld [vmem:[%s236 + $0x80] sm:$0xff]
          %v298 = vld [vmem:[%s236 + $0x88] sm:$0xff]
          %v299 = vld [vmem:[%s236 + $0x90] sm:$0xff]
          %v300 = vld [vmem:[%s236 + $0x98] sm:$0xff]
          %v301 = vld [vmem:[%s2] sm:$0xff]
          %303 = vset.pattern.permute.xlu0 0
          %304 = vperm.xlu0 %303, %v301
          %v305 = vpop.permute.xlu0 %304
          %vm307 = vcmask 326656
          %v309 = vsel %vm307, %v280, 0
          %311 = vmatprep.subr.mxu0 %v282
          %312 = vmatpush1.msra.mxu0 %v281
          %313 = vmatprep.subr.mxu0 %v286
          %314 = vmatpush1.msra.mxu0 %v285
          %315 = vmatprep.subr.mxu0 %v290
          %316 = vmatpush1.msra.mxu0 %v289
          %317 = vmatprep.subr.mxu0 %v294
          %318 = vmatpush1.msra.mxu0 %v293
          %319 = vmatprep.subr.mxu0 %v298
          %320 = vmatpush1.msra.mxu0 %v297
          %321 = vmatprep.subr.mxu0 0.0
          %322 = vmatpush1.msra.mxu0 0.0
          %323 = vmatprep.subr.mxu0 0.0
          %324 = vmatpush1.msra.mxu0 0.0
          %325 = vmatprep.subr.mxu0 0.0
          %326 = vmatpush1.msra.mxu0 0.0
          %327 = vmatprep.subr.mxu0 0.0
          %328 = vmatpush1.msra.mxu0 0.0
          %329 = vmatprep.subr.mxu0 0.0
          %330 = vmatpush1.msra.mxu0 0.0
          %331 = vmatprep.subr.mxu0 0.0
          %332 = vmatpush1.msra.mxu0 0.0
          %333 = vmatprep.subr.mxu0 0.0
          %334 = vmatpush1.msra.mxu0 0.0
          %335 = vmatprep.subr.mxu0 0.0
          %336 = vmatpush1.msra.mxu0 0.0
          %337 = vmatprep.subr.mxu0 0.0
          %338 = vmatpush1.msra.mxu0 0.0
          %339 = vmatprep.subr.mxu0 0.0
          %340 = vmatpush1.msra.mxu0 0.0
          %341 = vmatprep.subr.mxu0 0.0
          %342 = vmatpush1.msra.mxu0 0.0
          %343 = vmatprep.subr.mxu0 0.0
          %344 = vmatpush1.msra.mxu0 0.0
          %345 = vmatprep.subr.mxu0 0.0
          %346 = vmatpush1.msra.mxu0 0.0
          %347 = vmatprep.subr.mxu0 0.0
          %348 = vmatpush1.msra.mxu0 0.0
          %349 = vmatprep.subr.mxu0 0.0
          %350 = vmatpush1.msra.mxu0 0.0
          %351 = vmatprep.subr.mxu0 0.0
          %352 = vmatpush1.msra.mxu0 0.0
          %353 = vmatprep.subr.mxu0 0.0
          %354 = vmatpush1.msra.mxu0 0.0
          %355 = vmatprep.subr.mxu0 0.0
          %356 = vmatpush1.msra.mxu0 0.0
          %357 = vmatprep.subr.mxu0 0.0
          %358 = vmatpush1.msra.mxu0 0.0
          %359 = vmatprep.subr.mxu0 0.0
          %360 = vmatpush1.msra.mxu0 0.0
          %361 = vmatprep.subr.mxu0 0.0
          %362 = vmatpush1.msra.mxu0 0.0
          %363 = vmatprep.subr.mxu0 0.0
          %364 = vmatpush1.msra.mxu0 0.0
          %365 = vmatprep.subr.mxu0 0.0
          %366 = vmatpush1.msra.mxu0 0.0
          %367 = vmatprep.subr.mxu0 0.0
          %368 = vmatpush1.msra.mxu0 0.0
          %369 = vmatprep.subr.mxu0 0.0
          %370 = vmatpush1.msra.mxu0 0.0
          %371 = vmatprep.subr.mxu0 0.0
          %372 = vmatpush1.msra.mxu0 0.0
          %373 = vmatprep.subr.mxu0 0.0
          %374 = vmatpush1.msra.mxu0 0.0
          %375 = vmatprep.mubr.f32.mxu0 0.0
          %376 = vmatmul.mubr.f32.gmra.mrb[0].mxu0 %v309
          %v377 = vpop.f32.mrb[0].mxu0
          %v378 = vadd.f32 %v305, %v377
          %v379 = vpop.f32.mrb[0].mxu0
          %v380 = vadd.f32 %v305, %v379
          %381 = vdwg.mxu0
          %382 = vmatprep.subr.mxu0 %v284
          %383 = vmatpush1.msra.mxu0 %v283
          %384 = vmatprep.subr.mxu0 %v288
          %385 = vmatpush1.msra.mxu0 %v287
          %386 = vmatprep.subr.mxu0 %v292
          %387 = vmatpush1.msra.mxu0 %v291
          %388 = vmatprep.subr.mxu0 %v296
          %389 = vmatpush1.msra.mxu0 %v295
          %390 = vmatprep.subr.mxu0 %v300
          %391 = vmatpush1.msra.mxu0 %v299
          %392 = vmatprep.subr.mxu0 0.0
          %393 = vmatpush1.msra.mxu0 0.0
          %394 = vmatprep.subr.mxu0 0.0
          %395 = vmatpush1.msra.mxu0 0.0
          %396 = vmatprep.subr.mxu0 0.0
          %397 = vmatpush1.msra.mxu0 0.0
          %398 = vmatprep.subr.mxu0 0.0
          %399 = vmatpush1.msra.mxu0 0.0
          %400 = vmatprep.subr.mxu0 0.0
          %401 = vmatpush1.msra.mxu0 0.0
          %402 = vmatprep.subr.mxu0 0.0
          %403 = vmatpush1.msra.mxu0 0.0
          %404 = vmatprep.subr.mxu0 0.0
          %405 = vmatpush1.msra.mxu0 0.0
          %406 = vmatprep.subr.mxu0 0.0
          %407 = vmatpush1.msra.mxu0 0.0
          %408 = vmatprep.subr.mxu0 0.0
          %409 = vmatpush1.msra.mxu0 0.0
          %410 = vmatprep.subr.mxu0 0.0
          %411 = vmatpush1.msra.mxu0 0.0
          %412 = vmatprep.subr.mxu0 0.0
          %413 = vmatpush1.msra.mxu0 0.0
          %414 = vmatprep.subr.mxu0 0.0
          %415 = vmatpush1.msra.mxu0 0.0
          %416 = vmatprep.subr.mxu0 0.0
          %417 = vmatpush1.msra.mxu0 0.0
          %418 = vmatprep.subr.mxu0 0.0
          %419 = vmatpush1.msra.mxu0 0.0
          %420 = vmatprep.subr.mxu0 0.0
          %421 = vmatpush1.msra.mxu0 0.0
          %422 = vmatprep.subr.mxu0 0.0
          %423 = vmatpush1.msra.mxu0 0.0
          %424 = vmatprep.subr.mxu0 0.0
          %425 = vmatpush1.msra.mxu0 0.0
          %426 = vmatprep.subr.mxu0 0.0
          %427 = vmatpush1.msra.mxu0 0.0
          %428 = vmatprep.subr.mxu0 0.0
          %429 = vmatpush1.msra.mxu0 0.0
          %430 = vmatprep.subr.mxu0 0.0
          %431 = vmatpush1.msra.mxu0 0.0
          %432 = vmatprep.subr.mxu0 0.0
          %433 = vmatpush1.msra.mxu0 0.0
          %434 = vmatprep.subr.mxu0 0.0
          %435 = vmatpush1.msra.mxu0 0.0
          %436 = vmatprep.subr.mxu0 0.0
          %437 = vmatpush1.msra.mxu0 0.0
          %438 = vmatprep.subr.mxu0 0.0
          %439 = vmatpush1.msra.mxu0 0.0
          %440 = vmatprep.subr.mxu0 0.0
          %441 = vmatpush1.msra.mxu0 0.0
          %442 = vmatprep.subr.mxu0 0.0
          %443 = vmatpush1.msra.mxu0 0.0
          %444 = vmatprep.subr.mxu0 0.0
          %445 = vmatpush1.msra.mxu0 0.0
          %446 = vmatprep.mubr.f32.mxu0 0.0
          %447 = vmatmul.mubr.f32.gmra.mrb[0].mxu0 %v309
          %v448 = vpop.f32.mrb[0].mxu0
          %v449 = vadd.f32 %v305, %v448
          %v450 = vpop.f32.mrb[0].mxu0
          %v451 = vadd.f32 %v305, %v450
          %452 = vdwg.mxu0
          %s453 = sshra.s32 %s268, 7
          %s454 = sand.u32 %s268, 127
          %s455 = smul.addr %s453, 8
          %s456 = scalar_lea.vmem [#allocation2], %s455
          %457 = vst [vmem:[%s456] sm:$0xff] %v378
          %458 = vst [vmem:[%s456 + $0x8] sm:$0xff] %v380
          %459 = vst [vmem:[%s456 + $0x10] sm:$0xff] %v449
          %460 = vst [vmem:[%s456 + $0x18] sm:$0xff] %v451
          %v461 = vld [vmem:[#allocation3] sm:$0xff]
          %v462 = vadd.f32 %v378, %v380
          %v463 = vadd.f32 %v462, %v449
          %v464 = vadd.f32 %v463, %v451
          %465 = vadd.xlane.f32.xlu0 %v464
          %v466 = vpop.xlane.xlu0 %465
          %v467 = vadd.f32 %v461, %v466
          %vm468 = vcmask 7168
          %469 = vst.msk [vmem:[#allocation3] sm:$0xff] %vm468, %v467
          %v470 = vld [vmem:[#allocation4] sm:$0xff]
          %v471 = vmul.f32 %v378, %v378
          %v472 = vmul.f32 %v380, %v380
          %v473 = vmul.f32 %v449, %v449
          %v474 = vmul.f32 %v451, %v451
          %v475 = vadd.f32 %v471, %v472
          %v476 = vadd.f32 %v475, %v473
          %v477 = vadd.f32 %v476, %v474
          %478 = vadd.xlane.f32.xlu0 %v477
          %v479 = vpop.xlane.xlu0 %478
          %v480 = vadd.f32 %v470, %v479
          %481 = vst.msk [vmem:[#allocation4] sm:$0xff] %vm468, %v480
        $region48: #{tpu_custom_call.1} parent=39 // pred_fallthru
          _
        %p482 = scmp.eq.s32.totalorder %s26, 1
        // Predicated region
        $region53: #{tpu_custom_call.1} parent=39 // pred_check
          %p483 = pneg %p482
        $region54: #{tpu_custom_call.1} parent=39 // pred_check_branch
          %485 = sbr.rel (%p483) target = $region56
        $region55: #{tpu_custom_call.1} parent=39 // pred_region
          %p486 = scmp.eq.s32.totalorder %s27, 0
          // Predicated region
          $region57: #{tpu_custom_call.1} parent=55 // pred_check
            %p487 = pneg %p486
          $region58: #{tpu_custom_call.1} parent=55 // pred_check_branch
            %489 = sbr.rel (%p487) target = $region60
          $region59: #{tpu_custom_call.1} parent=55 // pred_region
            %v490 = vld [vmem:[#allocation3] sm:$0xff]
            %v491 = vmul.f32 %v490, 0.001953125
            %v492 = vld [vmem:[#allocation4] sm:$0xff]
            %v493 = vmul.f32 %v492, 0.001953125
            %v494 = vmul.f32 %v491, %v491
            %v495 = vsub.f32 %v493, %v494
            %v496 = vadd.f32 %v495, 1e-05
            %v497 = vrsqrt.pop %v496
            %v498 = vld [vmem:[%s3] sm:$0xff]
            %v499 = vmul.f32 %v498, %v497
            %vm500 = vcmask 7168
            %501 = vst.msk [vmem:[#allocation5] sm:$0xff] %vm500, %v499
            %v502 = vld [vmem:[%s4] sm:$0xff]
            %v503 = vmul.f32 %v491, %v499
            %v504 = vsub.f32 %v502, %v503
            %505 = vst.msk [vmem:[#allocation6] sm:$0xff] %vm500, %v504
          $region60: #{tpu_custom_call.1} parent=55 // pred_fallthru
            _
          %s506 = sshra.s32 %s268, 7
          %s507 = sand.u32 %s268, 127
          %s508 = smul.addr %s506, 8
          %s509 = scalar_lea.vmem [#allocation2], %s508
          %v510 = vld [vmem:[%s509] sm:$0xff]
          %v511 = vld [vmem:[%s509 + $0x8] sm:$0xff]
          %v512 = vld [vmem:[%s509 + $0x10] sm:$0xff]
          %v513 = vld [vmem:[%s509 + $0x18] sm:$0xff]
          %v514 = vld [vmem:[#allocation5] sm:$0xff]
          %516 = vset.pattern.permute.xlu0 0
          %517 = vperm.xlu0 %516, %v514
          %v518 = vpop.permute.xlu0 %517
          %v520 = vmul.f32 %v510, %v518
          %v521 = vmul.f32 %v511, %v518
          %v522 = vmul.f32 %v512, %v518
          %v523 = vmul.f32 %v513, %v518
          %v524 = vld [vmem:[#allocation6] sm:$0xff]
          %526 = vset.pattern.permute.xlu0 0
          %527 = vperm.xlu0 %526, %v524
          %v528 = vpop.permute.xlu0 %527
          %v530 = vadd.f32 %v520, %v528
          %v531 = vadd.f32 %v521, %v528
          %v532 = vadd.f32 %v522, %v528
          %v533 = vadd.f32 %v523, %v528
          %vm534 = vcmp.gt.f32.partialorder %v530, 0.0
          %vm535 = vcmp.gt.f32.partialorder %v531, 0.0
          %vm536 = vcmp.gt.f32.partialorder %v532, 0.0
          %vm537 = vcmp.gt.f32.partialorder %v533, 0.0
          %v538 = vmul.f32 %v530, 0.1
          %v539 = vmul.f32 %v531, 0.1
          %v540 = vmul.f32 %v532, 0.1
          %v541 = vmul.f32 %v533, 0.1
          %v542 = vsel %vm534, %v530, %v538
          %v543 = vsel %vm535, %v531, %v539
          %v544 = vsel %vm536, %v532, %v540
          %v545 = vsel %vm537, %v533, %v541
          %546 = vst [vmem:[%s262] sm:$0xff] %v542
          %547 = vst [vmem:[%s262 + $0x8] sm:$0xff] %v543
          %548 = vst [vmem:[%s262 + $0x10] sm:$0xff] %v544
          %549 = vst [vmem:[%s262 + $0x18] sm:$0xff] %v545
        $region56: #{tpu_custom_call.1} parent=39 // pred_fallthru
          _
        %s550 = sand.u32 %s158, 1
        %s551 = scalar_lea.sflag [#allocation9], %s550
        %s552 = sand.u32 %s158, 1
        %s553 = smul.addr %s552, 32
        %s554 = scalar_lea.vmem [#allocation10], %s553
        // Predicated region
        $region61: #{tpu_custom_call.1} parent=39 // pred_check
          %p555 = pneg %p168
        $region62: #{tpu_custom_call.1} parent=39 // pred_check_branch
          %557 = sbr.rel (%p555) target = $region64
        $region63: #{tpu_custom_call.1} parent=39 // pred_region
          %s558 = smul.u32 %s27, %s26
          %s559 = smul.u32 4, %s558
          %s561 = ssub.s32 512, 512
          %562 = vsyncadd %s551, %s561
          %s563 = smul.addr %s559, 128
          %s564 = scalar_lea.hbm %s5, %s563
          %s566 = sshll.u32 %s554, 4
          %s567 = int_to_ptr.vmem [resolvable:$true] %s566
          %569 = dma.vmem_to_hbm [thread:$0]  %s567, 512, %s564, %s551
        $region64: #{tpu_custom_call.1} parent=39 // pred_fallthru
          _
      $region40: #{tpu_custom_call.1} parent=5 // pred_fallthru
        _
      %p570 = scmp.le.s32.totalorder 2, %s17
      // Predicated region
      $region65: #{tpu_custom_call.1} parent=5 // pred_check
        %p571 = pneg %p570
      $region66: #{tpu_custom_call.1} parent=5 // pred_check_branch
        %573 = sbr.rel (%p571) target = $region68
      $region67: #{tpu_custom_call.1} parent=5 // pred_region
        %s574 = ssub.s32 %s17, 2
        // Predicated region
        $region69: #{tpu_custom_call.1} parent=67 // pred_check
          %p575 = pneg %p174
        $region70: #{tpu_custom_call.1} parent=67 // pred_check_branch
          %577 = sbr.rel (%p575) target = $region72
        $region71: #{tpu_custom_call.1} parent=67 // pred_region
          %s578 = sand.u32 %s159, 1
          %s579 = scalar_lea.sflag [#allocation9], %s578
          %s580 = sand.u32 %s159, 1
          %s581 = smul.addr %s580, 32
          %s582 = scalar_lea.vmem [#allocation10], %s581
          %583 = dma.done %s579, 512
        $region72: #{tpu_custom_call.1} parent=67 // pred_fallthru
          _
      $region68: #{tpu_custom_call.1} parent=5 // pred_fallthru
        _
    $region6: #{tpu_custom_call.1} parent=1 // loop_footer
      %s21 = sadd.s32 1, %s17
    $region7: #{tpu_custom_call.1} parent=1 // loop_footer_branch
      %16 = sbr.rel target = $region3
    $region8: #{tpu_custom_call.1} parent=1 // loop_exit
      _
    %584 = vsyncpa [#allocation8], 1
    %s585 = scalar_lea.sflag [#allocation8], 1
    %586 = vsyncpa %s585, 1
    %587 = vsyncpa [#allocation9], 1
    %s588 = scalar_lea.sflag [#allocation9], 1
    %589 = vsyncpa %s588, 1

</llo_original>
